<compile_context>
chip_gen: v5e
topology: v5e:2x2
jax: 0.10.0
libtpu: 0.0.40
codegen_flags: <defaults>
</compile_context>

<pallas_src>
import functools

import jax
import jax.numpy as jnp
from jax.experimental import pallas as pl
from jax.experimental.pallas import tpu as pltpu

IN_DIM = 12      # true input width
K_PAD = 16       # padded input width (bf16 sublane-friendly K)
PAD = 128        # lane width for all hidden layers (matches 128-wide MXU)
OUT_DIM = 3      # true output width
OUT_PAD = 8      # padded output width actually written back to HBM


def _round_up(n, m):
    return (n + m - 1) // m * m


def mlp_kernel(x_ref, w1_ref, w2_ref, w3_ref, w4_ref, b_ref, o_ref):
    f32, bf16 = jnp.float32, jnp.bfloat16
    b = b_ref[...]                                    # (4, 128) f32, zero-padded

    x = x_ref[...]                                    # (tb, 16) bf16 (cast in wrapper)
    # fc1 + relu   (bf16 MXU, f32 accumulate + epilogue)
    h = jnp.dot(x, w1_ref[...], preferred_element_type=f32)
    h = jnp.maximum(h + b[0:1, :], 0.0)
    # fc2 + relu
    h = jnp.dot(h.astype(bf16), w2_ref[...], preferred_element_type=f32)
    h = jnp.maximum(h + b[1:2, :], 0.0)
    # fc3 + relu
    h = jnp.dot(h.astype(bf16), w3_ref[...], preferred_element_type=f32)
    h = jnp.maximum(h + b[2:3, :], 0.0)
    # fc4 (no activation)
    h = jnp.dot(h.astype(bf16), w4_ref[...], preferred_element_type=f32)
    h = h + b[3:4, :]
    # Only the first OUT_PAD lanes go back to HBM (wrapper slices [:, :3]).
    o_ref[...] = h[:, : o_ref.shape[1]].astype(o_ref.dtype)


def prepare_params(params):
    """One-time preprocessing: pad/cast weights to bf16 MXU slabs + packed f32 bias.

    Run this ONCE (outside the per-call path) and pass the result to net_forward.
    """
    (w1, b1), (w2, b2), (w3, b3), (w4, b4) = params

    def pad_w(w, rows):
        out = jnp.zeros((rows, PAD), jnp.bfloat16)
        return out.at[: w.shape[0], : w.shape[1]].set(w.astype(jnp.bfloat16))

    w1p = pad_w(w1, K_PAD)   # (16, 128)   true 12x64
    w2p = pad_w(w2, PAD)     # (128, 128)  true 64x128
    w3p = pad_w(w3, PAD)     # (128, 128)  true 128x64
    w4p = pad_w(w4, PAD)     # (128, 128)  true 64x3

    bias = jnp.zeros((4, PAD), jnp.float32)
    for i, bb in enumerate((b1, b2, b3, b4)):
        bias = bias.at[i, : bb.shape[-1]].set(bb.reshape(-1))

    return w1p, w2p, w3p, w4p, bias


@functools.partial(jax.jit, static_argnames=("tile_b",))
def net_forward(x, packed_params, tile_b=4096):
    w1p, w2p, w3p, w4p, bias = packed_params
    B, in_dim = x.shape
    assert in_dim == IN_DIM

    # x: cast to bf16 (halves input DMA) and pad K 12 -> 16.
    x_bf = jnp.pad(x.astype(jnp.bfloat16), ((0, 0), (0, K_PAD - IN_DIM)))

    # Batch tiling: tile is a multiple of 8 (sublane); cap it so the grid has
    # at least 2 steps whenever B allows, so the "parallel" axis can shard
    # across v7x's 2 TensorCores.  Pad B up to a whole number of tiles so
    # every grid step is a full, unmasked block.
    tile_b = _round_up(max(int(tile_b), 8), 8)
    B8 = _round_up(B, 8)
    tb_cap = max(8, _round_up(pl.cdiv(B8, 2), 8))
    tb = min(tile_b, tb_cap)
    B_pad = _round_up(B8, tb)
    x_p = x_bf if B_pad == B else jnp.pad(x_bf, ((0, B_pad - B), (0, 0)))
    grid = (B_pad // tb,)

    # Padded (actual) work, so XLA schedules this correctly inside larger graphs.
    flops = 2 * B_pad * (K_PAD * PAD + 3 * PAD * PAD)
    bytes_accessed = (
        x_p.size * 2                                              # bf16 input
        + (w1p.size + w2p.size + w3p.size + w4p.size) * 2         # bf16 weights
        + bias.size * 4                                           # f32 bias slab
        + B_pad * OUT_PAD * 4                                     # f32 8-lane output
    )
    cost = pl.CostEstimate(
        flops=flops, transcendentals=0, bytes_accessed=bytes_accessed
    )

    out = pl.pallas_call(
        mlp_kernel,
        out_shape=jax.ShapeDtypeStruct((B_pad, OUT_PAD), jnp.float32),
        grid_spec=pltpu.PrefetchScalarGridSpec(
            num_scalar_prefetch=0,
            grid=grid,
            in_specs=[
                pl.BlockSpec((tb, K_PAD), lambda i: (i, 0)),     # x tile (bf16)
                pl.BlockSpec((K_PAD, PAD), lambda i: (0, 0)),    # w1 (VMEM-resident)
                pl.BlockSpec((PAD, PAD), lambda i: (0, 0)),      # w2 (VMEM-resident)
                pl.BlockSpec((PAD, PAD), lambda i: (0, 0)),      # w3 (VMEM-resident)
                pl.BlockSpec((PAD, PAD), lambda i: (0, 0)),      # w4 (VMEM-resident)
                pl.BlockSpec((4, PAD), lambda i: (0, 0)),        # packed biases
            ],
            out_specs=pl.BlockSpec((tb, OUT_PAD), lambda i: (i, 0)),
        ),
        compiler_params=pltpu.CompilerParams(
            dimension_semantics=("parallel",),
        ),
        cost_estimate=cost,
    )(x_p, w1p, w2p, w3p, w4p, bias)

    return out[:B, :OUT_DIM]


def init_linear(key, fan_in, fan_out):
    # Mimic PyTorch default nn.Linear init: U(-1/sqrt(fan_in), 1/sqrt(fan_in)).
    kw, kb = jax.random.split(key)
    bound = 1.0 / jnp.sqrt(float(fan_in))
    w = jax.random.uniform(kw, (fan_in, fan_out), jnp.float32, -bound, bound)
    b = jax.random.uniform(kb, (1, fan_out), jnp.float32, -bound, bound)
    return w, b


def reference(x, params):
    ref = x
    for i, (w, b) in enumerate(params):
        ref = ref @ w + b
        if i < 3:
            ref = jnp.maximum(ref, 0.0)
    return ref


if __name__ == "__main__":
    key = jax.random.PRNGKey(0)
    k_x, k_x2, k1, k2, k3, k4 = jax.random.split(key, 6)

    # Net: 12 -> 64 -> 128 -> 64 -> 3
    params = (
        init_linear(k1, 12, 64),
        init_linear(k2, 64, 128),
        init_linear(k3, 128, 64),
        init_linear(k4, 64, 3),
    )
    packed = prepare_params(params)          # one-time pad/cast, not per call
    packed = jax.block_until_ready(packed)

    # Small batch (matches the original usage).
    B = 8
    x = jax.random.normal(k_x, (B, 12), jnp.float32)
    out = net_forward(x, packed)
    jax.block_until_ready(out)
    ref = reference(x, params)
    assert out.shape == (B, 3), out.shape
    # bf16 matmul operands -> looser tolerance than pure-f32.
    assert jnp.allclose(out, ref, atol=5e-2, rtol=5e-2), "mismatch vs reference (B=8)"

    # Exercise the multi-tile grid path (grid > 1, batch padding, masked-lane store).
    B2 = 300
    x2 = jax.random.normal(k_x2, (B2, 12), jnp.float32)
    out2 = net_forward(x2, packed, tile_b=128)
    jax.block_until_ready(out2)
    ref2 = reference(x2, params)
    assert out2.shape == (B2, 3), out2.shape
    assert jnp.allclose(out2, ref2, atol=5e-2, rtol=5e-2), "mismatch vs reference (B=300)"

    print("KERNEL_OK")
</pallas_src>

<mosaic_0001>
module attributes {stable_mosaic.version = 11 : i64} {
  func.func @mlp_kernel(%arg0: i32, %arg1: memref<8x16xbf16, #tpu.memory_space<vmem>>, %arg2: memref<16x128xbf16, #tpu.memory_space<vmem>>, %arg3: memref<128x128xbf16, #tpu.memory_space<vmem>>, %arg4: memref<128x128xbf16, #tpu.memory_space<vmem>>, %arg5: memref<128x128xbf16, #tpu.memory_space<vmem>>, %arg6: memref<4x128xf32, #tpu.memory_space<vmem>>, %arg7: memref<8x8xf32, #tpu.memory_space<vmem>>) attributes {dimension_semantics = [#tpu.dimension_semantics<parallel>], iteration_bounds = array<i64: 1>, scalar_prefetch = 0 : i64, scratch_operands = 0 : i64, tpu.core_type = #tpu.core_type<tc>, window_params = [{transform_indices = @transform_0, window_bounds = array<i64: 8, 16>}, {pipeline_mode = #tpu.pipeline_mode<synchronous>, transform_indices = @transform_1, window_bounds = array<i64: 16, 128>}, {pipeline_mode = #tpu.pipeline_mode<synchronous>, transform_indices = @transform_2, window_bounds = array<i64: 128, 128>}, {pipeline_mode = #tpu.pipeline_mode<synchronous>, transform_indices = @transform_3, window_bounds = array<i64: 128, 128>}, {pipeline_mode = #tpu.pipeline_mode<synchronous>, transform_indices = @transform_4, window_bounds = array<i64: 128, 128>}, {pipeline_mode = #tpu.pipeline_mode<synchronous>, transform_indices = @transform_5, window_bounds = array<i64: 4, 128>}, {transform_indices = @transform_6, window_bounds = array<i64: 8, 8>}]} {
    %c0 = arith.constant 0 : index
    %c0_0 = arith.constant 0 : index
    %0 = vector.load %arg6[%c0, %c0_0] : memref<4x128xf32, #tpu.memory_space<vmem>>, vector<4x128xf32>
    %c0_1 = arith.constant 0 : index
    %c0_2 = arith.constant 0 : index
    %1 = vector.load %arg1[%c0_1, %c0_2] : memref<8x16xbf16, #tpu.memory_space<vmem>>, vector<8x16xbf16>
    %c0_3 = arith.constant 0 : index
    %c0_4 = arith.constant 0 : index
    %2 = vector.load %arg2[%c0_3, %c0_4] : memref<16x128xbf16, #tpu.memory_space<vmem>>, vector<16x128xbf16>
    %cst = arith.constant dense<0.000000e+00> : vector<8x128xf32>
    %3 = tpu.matmul %1, %2, %cst {dimension_numbers = #tpu.dot_dimension_numbers<[1], [0], [0], [1], [0, 0, 1, 1], [], []>} : vector<8x16xbf16>, vector<16x128xbf16>, vector<8x128xf32> -> vector<8x128xf32>
    %4 = vector.extract_strided_slice %0 {offsets = [0, 0], sizes = [1, 128], strides = [1, 1]} : vector<4x128xf32> to vector<1x128xf32>
    %5 = vector.broadcast %4 : vector<1x128xf32> to vector<8x128xf32>
    %6 = arith.addf %3, %5 : vector<8x128xf32>
    %cst_5 = arith.constant 0.000000e+00 : f32
    %7 = vector.broadcast %cst_5 : f32 to vector<8x128xf32>
    %8 = arith.maximumf %6, %7 : vector<8x128xf32>
    %9 = arith.truncf %8 : vector<8x128xf32> to vector<8x128xbf16>
    %c0_6 = arith.constant 0 : index
    %c0_7 = arith.constant 0 : index
    %10 = vector.load %arg3[%c0_6, %c0_7] : memref<128x128xbf16, #tpu.memory_space<vmem>>, vector<128x128xbf16>
    %cst_8 = arith.constant dense<0.000000e+00> : vector<8x128xf32>
    %11 = tpu.matmul %9, %10, %cst_8 {dimension_numbers = #tpu.dot_dimension_numbers<[1], [0], [0], [1], [0, 0, 1, 1], [], []>} : vector<8x128xbf16>, vector<128x128xbf16>, vector<8x128xf32> -> vector<8x128xf32>
    %12 = vector.extract_strided_slice %0 {offsets = [1, 0], sizes = [1, 128], strides = [1, 1]} : vector<4x128xf32> to vector<1x128xf32>
    %13 = vector.broadcast %12 : vector<1x128xf32> to vector<8x128xf32>
    %14 = arith.addf %11, %13 : vector<8x128xf32>
    %cst_9 = arith.constant 0.000000e+00 : f32
    %15 = vector.broadcast %cst_9 : f32 to vector<8x128xf32>
    %16 = arith.maximumf %14, %15 : vector<8x128xf32>
    %17 = arith.truncf %16 : vector<8x128xf32> to vector<8x128xbf16>
    %c0_10 = arith.constant 0 : index
    %c0_11 = arith.constant 0 : index
    %18 = vector.load %arg4[%c0_10, %c0_11] : memref<128x128xbf16, #tpu.memory_space<vmem>>, vector<128x128xbf16>
    %cst_12 = arith.constant dense<0.000000e+00> : vector<8x128xf32>
    %19 = tpu.matmul %17, %18, %cst_12 {dimension_numbers = #tpu.dot_dimension_numbers<[1], [0], [0], [1], [0, 0, 1, 1], [], []>} : vector<8x128xbf16>, vector<128x128xbf16>, vector<8x128xf32> -> vector<8x128xf32>
    %20 = vector.extract_strided_slice %0 {offsets = [2, 0], sizes = [1, 128], strides = [1, 1]} : vector<4x128xf32> to vector<1x128xf32>
    %21 = vector.broadcast %20 : vector<1x128xf32> to vector<8x128xf32>
    %22 = arith.addf %19, %21 : vector<8x128xf32>
    %cst_13 = arith.constant 0.000000e+00 : f32
    %23 = vector.broadcast %cst_13 : f32 to vector<8x128xf32>
    %24 = arith.maximumf %22, %23 : vector<8x128xf32>
    %25 = arith.truncf %24 : vector<8x128xf32> to vector<8x128xbf16>
    %c0_14 = arith.constant 0 : index
    %c0_15 = arith.constant 0 : index
    %26 = vector.load %arg5[%c0_14, %c0_15] : memref<128x128xbf16, #tpu.memory_space<vmem>>, vector<128x128xbf16>
    %cst_16 = arith.constant dense<0.000000e+00> : vector<8x128xf32>
    %27 = tpu.matmul %25, %26, %cst_16 {dimension_numbers = #tpu.dot_dimension_numbers<[1], [0], [0], [1], [0, 0, 1, 1], [], []>} : vector<8x128xbf16>, vector<128x128xbf16>, vector<8x128xf32> -> vector<8x128xf32>
    %28 = vector.extract_strided_slice %0 {offsets = [3, 0], sizes = [1, 128], strides = [1, 1]} : vector<4x128xf32> to vector<1x128xf32>
    %29 = vector.broadcast %28 : vector<1x128xf32> to vector<8x128xf32>
    %30 = arith.addf %27, %29 : vector<8x128xf32>
    %31 = vector.extract_strided_slice %30 {offsets = [0, 0], sizes = [8, 8], strides = [1, 1]} : vector<8x128xf32> to vector<8x8xf32>
    %c0_17 = arith.constant 0 : index
    %c0_18 = arith.constant 0 : index
    %32 = vector.load %arg7[%c0_17, %c0_18] : memref<8x8xf32, #tpu.memory_space<vmem>>, vector<8x8xf32>
    tpu.vector_store %arg7[%c0_17, %c0_18], %31 {strides = array<i32>} : memref<8x8xf32, #tpu.memory_space<vmem>>, vector<8x8xf32>,
    return
  }
  func.func @transform_0(%arg0: i32) -> (i32, i32) {
    %c0_i32 = arith.constant 0 : i32
    %c0_i32_0 = arith.constant 0 : i32
    return %arg0, %c0_i32 : i32, i32
  }
  func.func @transform_1(%arg0: i32) -> (i32, i32) {
    %c0_i32 = arith.constant 0 : i32
    %c0_i32_0 = arith.constant 0 : i32
    %c0_i32_1 = arith.constant 0 : i32
    return %c0_i32, %c0_i32_0 : i32, i32
  }
  func.func @transform_2(%arg0: i32) -> (i32, i32) {
    %c0_i32 = arith.constant 0 : i32
    %c0_i32_0 = arith.constant 0 : i32
    %c0_i32_1 = arith.constant 0 : i32
    return %c0_i32, %c0_i32_0 : i32, i32
  }
  func.func @transform_3(%arg0: i32) -> (i32, i32) {
    %c0_i32 = arith.constant 0 : i32
    %c0_i32_0 = arith.constant 0 : i32
    %c0_i32_1 = arith.constant 0 : i32
    return %c0_i32, %c0_i32_0 : i32, i32
  }
  func.func @transform_4(%arg0: i32) -> (i32, i32) {
    %c0_i32 = arith.constant 0 : i32
    %c0_i32_0 = arith.constant 0 : i32
    %c0_i32_1 = arith.constant 0 : i32
    return %c0_i32, %c0_i32_0 : i32, i32
  }
  func.func @transform_5(%arg0: i32) -> (i32, i32) {
    %c0_i32 = arith.constant 0 : i32
    %c0_i32_0 = arith.constant 0 : i32
    %c0_i32_1 = arith.constant 0 : i32
    return %c0_i32, %c0_i32_0 : i32, i32
  }
  func.func @transform_6(%arg0: i32) -> (i32, i32) {
    %c0_i32 = arith.constant 0 : i32
    %c0_i32_0 = arith.constant 0 : i32
    return %arg0, %c0_i32 : i32, i32
  }
}

</mosaic_0001>

<llo_original>
// kernel: net_forward.1
$region0: #{net_forward.1}
  #allocation0 [shape = 'u32[]', space=smem, size = 0x4, offset = 0x4, fixed_abs, tag = 'smem constant byte address 0x4 - core index']
  #allocation1 [shape = 'u32[72,128]{1,0:T(1,128)}', space=vmem, size = 0x9000, scoped, tag = 'internal scratch']
  %s0 = inlined_call_operand.vmem [shape: bf16[8,16], index: 0, kind: input, shape index: {}]
  %s1 = inlined_call_operand.vmem [shape: bf16[16,128], index: 1, kind: input, shape index: {}]
  %s2 = inlined_call_operand.hbm [shape: bf16[128,128], index: 2, kind: input, shape index: {}]
  %s3 = inlined_call_operand.hbm [shape: bf16[128,128], index: 3, kind: input, shape index: {}]
  %s4 = inlined_call_operand.hbm [shape: bf16[128,128], index: 4, kind: input, shape index: {}]
  %s5 = inlined_call_operand.vmem [shape: f32[4,128], index: 5, kind: input, shape index: {}]
  %s6 = inlined_call_operand.vmem [shape: f32[8,8], index: 6, kind: output, shape index: {}]
  %s7 = sld [smem:[#allocation0]]
  $region46: #{net_forward.1} parent=0
    _
  %s9 = ssub.s32 1, %s7
  %s10 = scalar_select 0, %s9, %s7
  $region1: #{net_forward.1} parent=0
    #allocation2 [shape = 'u8[32768]{0}', space=vmem, size = 0x8000, scoped, tag = 'input window, operand 2, single buffered']
    #allocation3 [shape = 's32[1]{0}', space=sflag, size = 0x4, scoped, tag = 'scoped memory for net_forward.1']
    #allocation4 [shape = 'u8[32768]{0}', space=vmem, size = 0x8000, scoped, tag = 'input window, operand 3, single buffered']
    #allocation5 [shape = 's32[1]{0}', space=sflag, size = 0x4, scoped, tag = 'scoped memory for net_forward.1']
    #allocation6 [shape = 'u8[32768]{0}', space=vmem, size = 0x8000, scoped, tag = 'input window, operand 4, single buffered']
    %11 = vsyncpa [#allocation3], 0
    %12 = vsyncpa [#allocation5], 0
    // Predicated region
    $region2: #{net_forward.1} parent=1 // pred_check
      _
    $region3: #{net_forward.1} parent=1 // pred_check_branch
      %14 = sbr.rel (0) target = $region5
    $region4: #{net_forward.1} parent=1 // pred_region
      _
    $region5: #{net_forward.1} parent=1 // pred_fallthru
      _
    // Predicated region
    $region6: #{net_forward.1} parent=1 // pred_check
      _
    $region7: #{net_forward.1} parent=1 // pred_check_branch
      %16 = sbr.rel (0) target = $region9
    $region8: #{net_forward.1} parent=1 // pred_region
      _
    $region9: #{net_forward.1} parent=1 // pred_fallthru
      _
    // Predicated region
    $region10: #{net_forward.1} parent=1 // pred_check
      _
    $region11: #{net_forward.1} parent=1 // pred_check_branch
      %18 = sbr.rel (0) target = $region13
    $region12: #{net_forward.1} parent=1 // pred_region
      %20 = vsyncadd [#allocation3], 0
      %s21 = sshll.u32 %s2, 4
      %s22 = int_to_ptr.hbm [resolvable:$true] %s21
      %s23 = sshll.u32 [#allocation2], 4
      %s24 = int_to_ptr.vmem [resolvable:$true] %s23
      %29 = dma.hbm_to_vmem [thread:$0]  %s22, 1024, %s24, [#allocation3], 64, 64, 4
    $region13: #{net_forward.1} parent=1 // pred_fallthru
      _
    // Predicated region
    $region14: #{net_forward.1} parent=1 // pred_check
      _
    $region15: #{net_forward.1} parent=1 // pred_check_branch
      %31 = sbr.rel (0) target = $region17
    $region16: #{net_forward.1} parent=1 // pred_region
      %33 = vsyncadd [#allocation5], 0
      %s34 = sshll.u32 %s3, 4
      %s35 = int_to_ptr.hbm [resolvable:$true] %s34
      %s36 = sshll.u32 [#allocation4], 4
      %s37 = int_to_ptr.vmem [resolvable:$true] %s36
      %42 = dma.hbm_to_vmem [thread:$0]  %s35, 1024, %s37, [#allocation5], 64, 64, 4
    $region17: #{net_forward.1} parent=1 // pred_fallthru
      _
    // Predicated region
    $region18: #{net_forward.1} parent=1 // pred_check
      _
    $region19: #{net_forward.1} parent=1 // pred_check_branch
      %44 = sbr.rel (0) target = $region21
    $region20: #{net_forward.1} parent=1 // pred_region
      %46 = vsyncadd [#allocation5], 0
      %s47 = sshll.u32 %s4, 4
      %s48 = int_to_ptr.hbm [resolvable:$true] %s47
      %s49 = sshll.u32 [#allocation6], 4
      %s50 = int_to_ptr.vmem [resolvable:$true] %s49
      %55 = dma.hbm_to_vmem [thread:$0]  %s48, 1024, %s50, [#allocation5], 64, 64, 4
    $region21: #{net_forward.1} parent=1 // pred_fallthru
      _
    // Predicated region
    $region22: #{net_forward.1} parent=1 // pred_check
      _
    $region23: #{net_forward.1} parent=1 // pred_check_branch
      %57 = sbr.rel (0) target = $region25
    $region24: #{net_forward.1} parent=1 // pred_region
      _
    $region25: #{net_forward.1} parent=1 // pred_fallthru
      _
    // Predicated region
    $region26: #{net_forward.1} parent=1 // pred_check
      _
    $region27: #{net_forward.1} parent=1 // pred_check_branch
      %59 = sbr.rel (0) target = $region29
    $region28: #{net_forward.1} parent=1 // pred_region
      %61 = dma.done [#allocation3], 1024
    $region29: #{net_forward.1} parent=1 // pred_fallthru
      _
    // Predicated region
    $region30: #{net_forward.1} parent=1 // pred_check
      _
    $region31: #{net_forward.1} parent=1 // pred_check_branch
      %63 = sbr.rel (0) target = $region33
    $region32: #{net_forward.1} parent=1 // pred_region
      %65 = dma.done [#allocation5], 1024
    $region33: #{net_forward.1} parent=1 // pred_fallthru
      _
    // Predicated region
    $region34: #{net_forward.1} parent=1 // pred_check
      _
    $region35: #{net_forward.1} parent=1 // pred_check_branch
      %67 = sbr.rel (0) target = $region37
    $region36: #{net_forward.1} parent=1 // pred_region
      %69 = dma.done [#allocation5], 1024
    $region37: #{net_forward.1} parent=1 // pred_fallthru
      _
    %v71 = vld [vmem:[%s5] sm:$0xf]
    %v72 = vld [vmem:[%s0] sm:$0xf]
    %v73 = vld [vmem:[%s1] sm:$0xf]
    %v74 = vld [vmem:[%s1 + $0x4] sm:$0xf]
    %v75 = vperm.slane %v71, 0
    %v78 = vunpack.c.l.b16 %v73
    %v79 = vunpack.c.l.b16 %v74
    %v80 = vpack.c.b16 %v79, %v78
    %vm82 = vcmask 130048
    %v84 = vsel %vm82, %v72, 0
    %86 = vmatpush.bf16.msra.mxu0 0
    %87 = vmatpush.bf16.msra.mxu0 0
    %88 = vmatpush.bf16.msra.mxu0 0
    %89 = vmatpush.bf16.msra.mxu0 0
    %90 = vmatpush.bf16.msra.mxu0 0
    %91 = vmatpush.bf16.msra.mxu0 0
    %92 = vmatpush.bf16.msra.mxu0 0
    %93 = vmatpush.bf16.msra.mxu0 %v80
    %94 = vmatmul.bf16.gmra.mxu0 %v84
    %v95 = vpop.f32.mrf.mxu0
    %v96 = vadd.f32 %v75, %v95
    %v97 = vpop.f32.mrf.mxu0
    %98 = vdwg.mxu0
    %v99 = vmax.f32 %v96, 0.0
    %v100 = vpack.c.bf16 %v99, %v99
    %v101 = vld [vmem:[#allocation2] sm:$0xf]
    %v102 = vld [vmem:[#allocation2 + $0x4] sm:$0xf]
    %v103 = vld [vmem:[#allocation2 + $0x8] sm:$0xf]
    %v104 = vld [vmem:[#allocation2 + $0xc] sm:$0xf]
    %v105 = vld [vmem:[#allocation2 + $0x10] sm:$0xf]
    %v106 = vld [vmem:[#allocation2 + $0x14] sm:$0xf]
    %v107 = vld [vmem:[#allocation2 + $0x18] sm:$0xf]
    %v108 = vld [vmem:[#allocation2 + $0x1c] sm:$0xf]
    %v109 = vld [vmem:[#allocation2 + $0x20] sm:$0xf]
    %v110 = vld [vmem:[#allocation2 + $0x24] sm:$0xf]
    %v111 = vld [vmem:[#allocation2 + $0x28] sm:$0xf]
    %v112 = vld [vmem:[#allocation2 + $0x2c] sm:$0xf]
    %v113 = vld [vmem:[#allocation2 + $0x30] sm:$0xf]
    %v114 = vld [vmem:[#allocation2 + $0x34] sm:$0xf]
    %v115 = vld [vmem:[#allocation2 + $0x38] sm:$0xf]
    %v116 = vld [vmem:[#allocation2 + $0x3c] sm:$0xf]
    %v117 = vperm.slane %v71, 1
    %v134 = vunpack.c.l.b16 %v101
    %v135 = vunpack.c.l.b16 %v102
    %v136 = vunpack.c.l.b16 %v103
    %v137 = vunpack.c.l.b16 %v104
    %v138 = vunpack.c.l.b16 %v105
    %v139 = vunpack.c.l.b16 %v106
    %v140 = vunpack.c.l.b16 %v107
    %v141 = vunpack.c.l.b16 %v108
    %v142 = vunpack.c.l.b16 %v109
    %v143 = vunpack.c.l.b16 %v110
    %v144 = vunpack.c.l.b16 %v111
    %v145 = vunpack.c.l.b16 %v112
    %v146 = vunpack.c.l.b16 %v113
    %v147 = vunpack.c.l.b16 %v114
    %v148 = vunpack.c.l.b16 %v115
    %v149 = vunpack.c.l.b16 %v116
    %v150 = vpack.c.b16 %v135, %v134
    %v151 = vpack.c.b16 %v137, %v136
    %v152 = vpack.c.b16 %v139, %v138
    %v153 = vpack.c.b16 %v141, %v140
    %v154 = vpack.c.b16 %v143, %v142
    %v155 = vpack.c.b16 %v145, %v144
    %v156 = vpack.c.b16 %v147, %v146
    %v157 = vpack.c.b16 %v149, %v148
    %166 = vmatpush.bf16.msra.mxu0 %v157
    %167 = vmatpush.bf16.msra.mxu0 %v156
    %168 = vmatpush.bf16.msra.mxu0 %v155
    %169 = vmatpush.bf16.msra.mxu0 %v154
    %170 = vmatpush.bf16.msra.mxu0 %v153
    %171 = vmatpush.bf16.msra.mxu0 %v152
    %172 = vmatpush.bf16.msra.mxu0 %v151
    %173 = vmatpush.bf16.msra.mxu0 %v150
    %174 = vmatmul.bf16.gmra.mxu0 %v100
    %v175 = vpop.f32.mrf.mxu0
    %v176 = vadd.f32 %v117, %v175
    %v177 = vpop.f32.mrf.mxu0
    %178 = vdwg.mxu0
    %v179 = vmax.f32 %v176, 0.0
    %v180 = vpack.c.bf16 %v179, %v179
    %v181 = vld [vmem:[#allocation4] sm:$0xf]
    %v182 = vld [vmem:[#allocation4 + $0x4] sm:$0xf]
    %v183 = vld [vmem:[#allocation4 + $0x8] sm:$0xf]
    %v184 = vld [vmem:[#allocation4 + $0xc] sm:$0xf]
    %v185 = vld [vmem:[#allocation4 + $0x10] sm:$0xf]
    %v186 = vld [vmem:[#allocation4 + $0x14] sm:$0xf]
    %v187 = vld [vmem:[#allocation4 + $0x18] sm:$0xf]
    %v188 = vld [vmem:[#allocation4 + $0x1c] sm:$0xf]
    %v189 = vld [vmem:[#allocation4 + $0x20] sm:$0xf]
    %v190 = vld [vmem:[#allocation4 + $0x24] sm:$0xf]
    %v191 = vld [vmem:[#allocation4 + $0x28] sm:$0xf]
    %v192 = vld [vmem:[#allocation4 + $0x2c] sm:$0xf]
    %v193 = vld [vmem:[#allocation4 + $0x30] sm:$0xf]
    %v194 = vld [vmem:[#allocation4 + $0x34] sm:$0xf]
    %v195 = vld [vmem:[#allocation4 + $0x38] sm:$0xf]
    %v196 = vld [vmem:[#allocation4 + $0x3c] sm:$0xf]
    %v197 = vperm.slane %v71, 2
    %v214 = vunpack.c.l.b16 %v181
    %v215 = vunpack.c.l.b16 %v182
    %v216 = vunpack.c.l.b16 %v183
    %v217 = vunpack.c.l.b16 %v184
    %v218 = vunpack.c.l.b16 %v185
    %v219 = vunpack.c.l.b16 %v186
    %v220 = vunpack.c.l.b16 %v187
    %v221 = vunpack.c.l.b16 %v188
    %v222 = vunpack.c.l.b16 %v189
    %v223 = vunpack.c.l.b16 %v190
    %v224 = vunpack.c.l.b16 %v191
    %v225 = vunpack.c.l.b16 %v192
    %v226 = vunpack.c.l.b16 %v193
    %v227 = vunpack.c.l.b16 %v194
    %v228 = vunpack.c.l.b16 %v195
    %v229 = vunpack.c.l.b16 %v196
    %v230 = vpack.c.b16 %v215, %v214
    %v231 = vpack.c.b16 %v217, %v216
    %v232 = vpack.c.b16 %v219, %v218
    %v233 = vpack.c.b16 %v221, %v220
    %v234 = vpack.c.b16 %v223, %v222
    %v235 = vpack.c.b16 %v225, %v224
    %v236 = vpack.c.b16 %v227, %v226
    %v237 = vpack.c.b16 %v229, %v228
    %246 = vmatpush.bf16.msra.mxu0 %v237
    %247 = vmatpush.bf16.msra.mxu0 %v236
    %248 = vmatpush.bf16.msra.mxu0 %v235
    %249 = vmatpush.bf16.msra.mxu0 %v234
    %250 = vmatpush.bf16.msra.mxu0 %v233
    %251 = vmatpush.bf16.msra.mxu0 %v232
    %252 = vmatpush.bf16.msra.mxu0 %v231
    %253 = vmatpush.bf16.msra.mxu0 %v230
    %254 = vmatmul.bf16.gmra.mxu0 %v180
    %v255 = vpop.f32.mrf.mxu0
    %v256 = vadd.f32 %v197, %v255
    %v257 = vpop.f32.mrf.mxu0
    %258 = vdwg.mxu0
    %v259 = vmax.f32 %v256, 0.0
    %v260 = vpack.c.bf16 %v259, %v259
    %v261 = vld [vmem:[#allocation6] sm:$0xf]
    %v262 = vld [vmem:[#allocation6 + $0x4] sm:$0xf]
    %v263 = vld [vmem:[#allocation6 + $0x8] sm:$0xf]
    %v264 = vld [vmem:[#allocation6 + $0xc] sm:$0xf]
    %v265 = vld [vmem:[#allocation6 + $0x10] sm:$0xf]
    %v266 = vld [vmem:[#allocation6 + $0x14] sm:$0xf]
    %v267 = vld [vmem:[#allocation6 + $0x18] sm:$0xf]
    %v268 = vld [vmem:[#allocation6 + $0x1c] sm:$0xf]
    %v269 = vld [vmem:[#allocation6 + $0x20] sm:$0xf]
    %v270 = vld [vmem:[#allocation6 + $0x24] sm:$0xf]
    %v271 = vld [vmem:[#allocation6 + $0x28] sm:$0xf]
    %v272 = vld [vmem:[#allocation6 + $0x2c] sm:$0xf]
    %v273 = vld [vmem:[#allocation6 + $0x30] sm:$0xf]
    %v274 = vld [vmem:[#allocation6 + $0x34] sm:$0xf]
    %v275 = vld [vmem:[#allocation6 + $0x38] sm:$0xf]
    %v276 = vld [vmem:[#allocation6 + $0x3c] sm:$0xf]
    %v277 = vperm.slane %v71, 3
    %v294 = vunpack.c.l.b16 %v261
    %v295 = vunpack.c.l.b16 %v262
    %v296 = vunpack.c.l.b16 %v263
    %v297 = vunpack.c.l.b16 %v264
    %v298 = vunpack.c.l.b16 %v265
    %v299 = vunpack.c.l.b16 %v266
    %v300 = vunpack.c.l.b16 %v267
    %v301 = vunpack.c.l.b16 %v268
    %v302 = vunpack.c.l.b16 %v269
    %v303 = vunpack.c.l.b16 %v270
    %v304 = vunpack.c.l.b16 %v271
    %v305 = vunpack.c.l.b16 %v272
    %v306 = vunpack.c.l.b16 %v273
    %v307 = vunpack.c.l.b16 %v274
    %v308 = vunpack.c.l.b16 %v275
    %v309 = vunpack.c.l.b16 %v276
    %v310 = vpack.c.b16 %v295, %v294
    %v311 = vpack.c.b16 %v297, %v296
    %v312 = vpack.c.b16 %v299, %v298
    %v313 = vpack.c.b16 %v301, %v300
    %v314 = vpack.c.b16 %v303, %v302
    %v315 = vpack.c.b16 %v305, %v304
    %v316 = vpack.c.b16 %v307, %v306
    %v317 = vpack.c.b16 %v309, %v308
    %326 = vmatpush.bf16.msra.mxu0 %v317
    %327 = vmatpush.bf16.msra.mxu0 %v316
    %328 = vmatpush.bf16.msra.mxu0 %v315
    %329 = vmatpush.bf16.msra.mxu0 %v314
    %330 = vmatpush.bf16.msra.mxu0 %v313
    %331 = vmatpush.bf16.msra.mxu0 %v312
    %332 = vmatpush.bf16.msra.mxu0 %v311
    %333 = vmatpush.bf16.msra.mxu0 %v310
    %334 = vmatmul.bf16.gmra.mxu0 %v260
    %v335 = vpop.f32.mrf.mxu0
    %v336 = vadd.f32 %v277, %v335
    %v337 = vpop.f32.mrf.mxu0
    %338 = vdwg.mxu0
    %vm339 = vcmask 64512
    %340 = vst.msk [vmem:[%s6] sm:$0xff] %vm339, %v336
    // Predicated region
    $region38: #{net_forward.1} parent=1 // pred_check
      _
    $region39: #{net_forward.1} parent=1 // pred_check_branch
      %342 = sbr.rel (0) target = $region41
    $region40: #{net_forward.1} parent=1 // pred_region
      _
    $region41: #{net_forward.1} parent=1 // pred_fallthru
      _
    // Predicated region
    $region42: #{net_forward.1} parent=1 // pred_check
      _
    $region43: #{net_forward.1} parent=1 // pred_check_branch
      %344 = sbr.rel (0) target = $region45
    $region44: #{net_forward.1} parent=1 // pred_region
      _
    $region45: #{net_forward.1} parent=1 // pred_fallthru
      _
    %345 = vsyncpa [#allocation3], 1
    %346 = vsyncpa [#allocation5], 1

</llo_original>
